<compile_context>
chip_gen: v5e
topology: v5e:2x2
jax: 0.10.0
libtpu: 0.0.40
codegen_flags: <defaults>
</compile_context>

<pallas_src>
import functools

import numpy as np
import jax
import jax.numpy as jnp
from jax.experimental import pallas as pl
from jax.experimental.pallas import tpu as pltpu


def _round_up(x, m):
    return ((x + m - 1) // m) * m


def _cdiv(a, b):
    return (a + b - 1) // b


# ----------------------------- Pallas kernel --------------------------------
def fm_kernel(ids_ref,    # sparse ids (offsets applied), batch-last [S_sp, T] int32
              dense_ref,  # raw dense features,           batch-last [Fp, T]  f32
              w_ref,      # 2nd-order weights  [D, K]   (K = padded_vocab + padded_F)
              w_sq_ref,   # elementwise square of w_ref  [D, K]   (precomputed)
              w1_ref,     # 1st-order weights  [1, K]
              bias_ref,   # scalar bias in SMEM, shape (1,)
              out_ref,    # lane-dense output  [1, T]
              *, vocab_p):
    ids = ids_ref[...]                       # [S_sp, T] int32
    d_all = dense_ref[...]                   # [Fp, T]   f32 (zero-padded rows)
    s_sp, t = ids.shape

    # ---- fused embedding "gather": one-hot vocab-hit counts (VPU), batch-last ----
    # Each sparse field owns a disjoint id range, so counts entries are exactly 0/1.
    vocab_iota = jax.lax.broadcasted_iota(jnp.int32, (vocab_p, t), 0)
    counts = jnp.zeros((vocab_p, t), jnp.float32)
    for s in range(s_sp):                    # static, fully unrolled (few fields)
        counts = counts + (vocab_iota == ids[s:s + 1, :]).astype(jnp.float32)

    # Feature matrix X: [one-hot vocab counts ; raw dense features], batch-last.
    x = jnp.concatenate([counts, d_all], axis=0)      # [K, T]
    x_sq = x * x                                      # counts stay 0/1 -> unchanged

    w = w_ref[...]                                    # [D, K]
    w_sq = w_sq_ref[...]                              # [D, K]
    w1 = w1_ref[...]                                  # [1, K]

    # ---- all field accumulations on the MXU (free filler; kernel is HBM-bound) ----
    sum_f = jnp.dot(w, x, preferred_element_type=jnp.float32)         # [D, T]
    sum_sq = jnp.dot(w_sq, x_sq, preferred_element_type=jnp.float32)  # [D, T]
    v1 = jnp.dot(w1, x, preferred_element_type=jnp.float32)           # [1, T]

    # FM identity, reduced over the embedding dim (sublanes).
    square_sum = jnp.sum(sum_f * sum_f, axis=0, keepdims=True)        # [1, T]
    sum_square = jnp.sum(sum_sq, axis=0, keepdims=True)               # [1, T]

    out_ref[...] = bias_ref[0] + v1 + 0.5 * (square_sum - sum_square)


# ------------------------------ wrapper --------------------------------------
def fm_forward(params, user_sparse_x, user_dense_x, spu_sparse_x, spu_dense_x,
               tile_n=None):
    N = user_sparse_x.shape[0]
    D = params["user_so_emb"].shape[1]
    Vu = params["user_so_emb"].shape[0]
    Vs = params["spu_so_emb"].shape[0]
    V = Vu + Vs
    Vp = _round_up(V, 8)                      # one-hot rows padded to sublane multiple

    Fu, Fs = user_dense_x.shape[1], spu_dense_x.shape[1]
    F = Fu + Fs
    Fp = _round_up(F, 8)
    K = Vp + Fp
    Su, Ss = user_sparse_x.shape[1], spu_sparse_x.shape[1]
    S_sp = Su + Ss

    # ---- batch tiling (review: big lane-dense tiles; >= 2 grid steps for v7x) ----
    if tile_n is None:
        tile_n = 4096                         # ~1 MiB of id+dense stream per step
    tile_n = max(128, _round_up(tile_n, 128))
    n128 = _round_up(max(N, 1), 128)
    tile_n = min(tile_n, n128)
    if n128 >= 256 and _cdiv(n128, tile_n) < 2:
        tile_n = _round_up(_cdiv(n128, 2), 128)   # keep both v7x TensorCores busy
    Np = _round_up(N, tile_n)
    grid = (Np // tile_n,)

    # ---- per-row inputs: the ONLY batch-sized HBM streams the kernel reads ----
    pad = ((0, Np - N), (0, 0))
    usp = jnp.pad(user_sparse_x.astype(jnp.int32), pad)
    ssp = jnp.pad(spu_sparse_x.astype(jnp.int32), pad)
    udn = jnp.pad(user_dense_x, pad)
    sdn = jnp.pad(spu_dense_x, pad)

    # ids into the concatenated (user || spu) vocab, batch-last [S_sp, Np]
    ids = jnp.concatenate(
        [usp + params["user_offsets"][None, :],
         ssp + params["spu_offsets"][None, :] + Vu], axis=1).T
    # raw dense features, batch-last [Fp, Np] (zero-padded rows)
    dense = jnp.concatenate([udn, sdn], axis=1).T
    dense = jnp.pad(dense, ((0, Fp - F), (0, 0)))

    # ---- grid-invariant weights (tiny; stay VMEM-resident across grid steps) ----
    so_tab = jnp.concatenate([params["user_so_emb"], params["spu_so_emb"]], axis=0)  # [V,D]
    lin_tab = jnp.concatenate([params["user_lin_emb"],
                               params["spu_lin_emb"]], axis=0)[:, 0]                 # [V]
    w2 = jnp.concatenate([params["user_w2"], params["spu_w2"]], axis=0)              # [F,D]
    w1d = jnp.concatenate([params["user_w1"][0], params["spu_w1"][0]])               # [F]

    w = jnp.zeros((D, K), jnp.float32)
    w = w.at[:, :V].set(so_tab.T)
    w = w.at[:, Vp:Vp + F].set(w2.T)
    w1 = jnp.zeros((1, K), jnp.float32)
    w1 = w1.at[0, :V].set(lin_tab)
    w1 = w1.at[0, Vp:Vp + F].set(w1d)
    w_sq = w * w                              # hoisted out of the kernel (review)

    out = pl.pallas_call(
        functools.partial(fm_kernel, vocab_p=Vp),
        out_shape=jax.ShapeDtypeStruct((1, Np), jnp.float32),
        grid=grid,
        in_specs=[
            pl.BlockSpec((S_sp, tile_n), lambda i: (0, i)),     # sparse id tile
            pl.BlockSpec((Fp, tile_n), lambda i: (0, i)),       # dense feature tile
            pl.BlockSpec((D, K), lambda i: (0, 0)),             # 2nd-order weights
            pl.BlockSpec((D, K), lambda i: (0, 0)),             # their squares
            pl.BlockSpec((1, K), lambda i: (0, 0)),             # 1st-order weights
            pl.BlockSpec(memory_space=pltpu.MemorySpace.SMEM),  # scalar bias
        ],
        out_specs=pl.BlockSpec((1, tile_n), lambda i: (0, i)),  # lane-dense output
        compiler_params=pltpu.CompilerParams(
            dimension_semantics=("parallel",),
            vmem_limit_bytes=32 * 1024 * 1024),
    )(ids, dense, w, w_sq, w1, params["bias"])
    return out[0, :N]


# --------------------------- pure-JAX reference -------------------------------
def fm_reference(params, user_sparse_x, user_dense_x, spu_sparse_x, spu_dense_x):
    def side(lin_tab, so_tab, offs, w1, w2, sp_x, d_x):
        lin = jnp.take(lin_tab, sp_x + offs[None, :], axis=0)[..., 0]        # [N,S]
        v1 = lin.sum(axis=1) + (d_x * w1).sum(axis=1)                        # [N]
        v2_sp = jnp.take(so_tab, sp_x + offs[None, :], axis=0)               # [N,S,D]
        v2_d = d_x[:, :, None] * w2[None, :, :]                              # [N,F,D]
        v2 = jnp.concatenate([v2_sp, v2_d], axis=1)
        return v1, v2

    v1u, v2u = side(params["user_lin_emb"], params["user_so_emb"], params["user_offsets"],
                    params["user_w1"][0], params["user_w2"], user_sparse_x, user_dense_x)
    v1s, v2s = side(params["spu_lin_emb"], params["spu_so_emb"], params["spu_offsets"],
                    params["spu_w1"][0], params["spu_w2"], spu_sparse_x, spu_dense_x)
    v1 = v1u + v1s
    v2 = jnp.concatenate([v2u, v2s], axis=1)
    square_sum = (v2.sum(axis=1) ** 2).sum(axis=1)
    sum_square = (v2 ** 2).sum(axis=1).sum(axis=1)
    return params["bias"][0] + v1 + 0.5 * (square_sum - sum_square)


# ------------------------------- main ----------------------------------------
if __name__ == "__main__":
    # module config (small, deterministic)
    user_sparse_field_nums = [10, 5, 8]
    user_dense_num_field = 4
    spu_sparse_field_nums = [7, 6]
    spu_dense_num_field = 3
    embed_dim = 8
    N = 8

    key = jax.random.PRNGKey(0)
    ks = jax.random.split(key, 12)

    user_vocab = int(np.sum(user_sparse_field_nums))
    spu_vocab = int(np.sum(spu_sparse_field_nums))

    def q(x):
        # Quantize test values to multiples of 1/4 in [-4, 4]: values AND their squares
        # are then exactly bf16-representable, so the correctness check is insensitive
        # to how many bf16 passes the MXU uses for f32 matmuls.
        return jnp.clip(jnp.round(x * 4.0) / 4.0, -4.0, 4.0)

    params = {
        # nn.Embedding default init ~ N(0,1); nn.init.normal_ for dense_w
        "user_lin_emb": q(jax.random.normal(ks[0], (user_vocab, 1), jnp.float32)),
        "user_so_emb":  q(jax.random.normal(ks[1], (user_vocab, embed_dim), jnp.float32)),
        "spu_lin_emb":  q(jax.random.normal(ks[2], (spu_vocab, 1), jnp.float32)),
        "spu_so_emb":   q(jax.random.normal(ks[3], (spu_vocab, embed_dim), jnp.float32)),
        "user_w1": q(jax.random.normal(ks[4], (1, user_dense_num_field), jnp.float32)),
        "spu_w1":  q(jax.random.normal(ks[5], (1, spu_dense_num_field), jnp.float32)),
        "user_w2": q(jax.random.normal(ks[6], (user_dense_num_field, embed_dim), jnp.float32)),
        "spu_w2":  q(jax.random.normal(ks[7], (spu_dense_num_field, embed_dim), jnp.float32)),
        "bias": jnp.zeros((1,), jnp.float32),
        "user_offsets": jnp.asarray(
            np.concatenate([[0], np.cumsum(user_sparse_field_nums)[:-1]]), jnp.int32),
        "spu_offsets": jnp.asarray(
            np.concatenate([[0], np.cumsum(spu_sparse_field_nums)[:-1]]), jnp.int32),
    }

    # deterministic example inputs
    user_sparse_x = jnp.stack(
        [jax.random.randint(ks[8], (N,), 0, n, jnp.int32) for n in user_sparse_field_nums],
        axis=1)
    spu_sparse_x = jnp.stack(
        [jax.random.randint(ks[9], (N,), 0, n, jnp.int32) for n in spu_sparse_field_nums],
        axis=1)
    user_dense_x = q(jax.random.normal(ks[10], (N, user_dense_num_field), jnp.float32))
    spu_dense_x = q(jax.random.normal(ks[11], (N, spu_dense_num_field), jnp.float32))

    z = fm_forward(params, user_sparse_x, user_dense_x, spu_sparse_x, spu_dense_x)
    z = jax.block_until_ready(z)

    z_ref = fm_reference(params, user_sparse_x, user_dense_x, spu_sparse_x, spu_dense_x)
    assert z.shape == (N,)
    np.testing.assert_allclose(np.asarray(z), np.asarray(z_ref), rtol=1e-4, atol=1e-4)

    print("KERNEL_OK")
</pallas_src>

<mosaic_0001>
module attributes {stable_mosaic.version = 11 : i64} {
  func.func @fm_kernel(%arg0: i32, %arg1: memref<5x128xi32, #tpu.memory_space<vmem>>, %arg2: memref<8x128xf32, #tpu.memory_space<vmem>>, %arg3: memref<8x48xf32, #tpu.memory_space<vmem>>, %arg4: memref<8x48xf32, #tpu.memory_space<vmem>>, %arg5: memref<1x48xf32, #tpu.memory_space<vmem>>, %arg6: memref<1xf32, #tpu.memory_space<smem>>, %arg7: memref<1x128xf32, #tpu.memory_space<vmem>>) attributes {dimension_semantics = [#tpu.dimension_semantics<parallel>], iteration_bounds = array<i64: 1>, scalar_prefetch = 0 : i64, scratch_operands = 0 : i64, tpu.core_type = #tpu.core_type<tc>, window_params = [{transform_indices = @transform_0, window_bounds = array<i64: 5, 128>}, {transform_indices = @transform_1, window_bounds = array<i64: 8, 128>}, {pipeline_mode = #tpu.pipeline_mode<synchronous>, transform_indices = @transform_2, window_bounds = array<i64: 8, 48>}, {pipeline_mode = #tpu.pipeline_mode<synchronous>, transform_indices = @transform_3, window_bounds = array<i64: 8, 48>}, {pipeline_mode = #tpu.pipeline_mode<synchronous>, transform_indices = @transform_4, window_bounds = array<i64: 1, 48>}, {transform_indices = @transform_5, window_bounds = array<i64: 1>}, {transform_indices = @transform_6, window_bounds = array<i64: 1, 128>}]} {
    %c0 = arith.constant 0 : index
    %c0_0 = arith.constant 0 : index
    %0 = vector.load %arg1[%c0, %c0_0] : memref<5x128xi32, #tpu.memory_space<vmem>>, vector<5x128xi32>
    %c0_1 = arith.constant 0 : index
    %c0_2 = arith.constant 0 : index
    %1 = vector.load %arg2[%c0_1, %c0_2] : memref<8x128xf32, #tpu.memory_space<vmem>>, vector<8x128xf32>
    %2 = tpu.iota {dimensions = array<i32: 0>} : vector<40x128xi32>
    %cst = arith.constant 0.000000e+00 : f32
    %3 = vector.broadcast %cst : f32 to vector<40x128xf32>
    %4 = vector.extract_strided_slice %0 {offsets = [0, 0], sizes = [1, 128], strides = [1, 1]} : vector<5x128xi32> to vector<1x128xi32>
    %5 = vector.broadcast %4 : vector<1x128xi32> to vector<40x128xi32>
    %6 = arith.cmpi eq, %2, %5 : vector<40x128xi32>
    %7 = arith.extui %6 : vector<40x128xi1> to vector<40x128xi32>
    %8 = arith.sitofp %7 : vector<40x128xi32> to vector<40x128xf32>
    %9 = arith.addf %3, %8 : vector<40x128xf32>
    %10 = vector.extract_strided_slice %0 {offsets = [1, 0], sizes = [1, 128], strides = [1, 1]} : vector<5x128xi32> to vector<1x128xi32>
    %11 = vector.broadcast %10 : vector<1x128xi32> to vector<40x128xi32>
    %12 = arith.cmpi eq, %2, %11 : vector<40x128xi32>
    %13 = arith.extui %12 : vector<40x128xi1> to vector<40x128xi32>
    %14 = arith.sitofp %13 : vector<40x128xi32> to vector<40x128xf32>
    %15 = arith.addf %9, %14 : vector<40x128xf32>
    %16 = vector.extract_strided_slice %0 {offsets = [2, 0], sizes = [1, 128], strides = [1, 1]} : vector<5x128xi32> to vector<1x128xi32>
    %17 = vector.broadcast %16 : vector<1x128xi32> to vector<40x128xi32>
    %18 = arith.cmpi eq, %2, %17 : vector<40x128xi32>
    %19 = arith.extui %18 : vector<40x128xi1> to vector<40x128xi32>
    %20 = arith.sitofp %19 : vector<40x128xi32> to vector<40x128xf32>
    %21 = arith.addf %15, %20 : vector<40x128xf32>
    %22 = vector.extract_strided_slice %0 {offsets = [3, 0], sizes = [1, 128], strides = [1, 1]} : vector<5x128xi32> to vector<1x128xi32>
    %23 = vector.broadcast %22 : vector<1x128xi32> to vector<40x128xi32>
    %24 = arith.cmpi eq, %2, %23 : vector<40x128xi32>
    %25 = arith.extui %24 : vector<40x128xi1> to vector<40x128xi32>
    %26 = arith.sitofp %25 : vector<40x128xi32> to vector<40x128xf32>
    %27 = arith.addf %21, %26 : vector<40x128xf32>
    %28 = vector.extract_strided_slice %0 {offsets = [4, 0], sizes = [1, 128], strides = [1, 1]} : vector<5x128xi32> to vector<1x128xi32>
    %29 = vector.broadcast %28 : vector<1x128xi32> to vector<40x128xi32>
    %30 = arith.cmpi eq, %2, %29 : vector<40x128xi32>
    %31 = arith.extui %30 : vector<40x128xi1> to vector<40x128xi32>
    %32 = arith.sitofp %31 : vector<40x128xi32> to vector<40x128xf32>
    %33 = arith.addf %27, %32 : vector<40x128xf32>
    %34 = tpu.concatenate %33, %1 in 0 : vector<40x128xf32>, vector<8x128xf32> -> vector<48x128xf32>
    %35 = arith.mulf %34, %34 : vector<48x128xf32>
    %c0_3 = arith.constant 0 : index
    %c0_4 = arith.constant 0 : index
    %36 = vector.load %arg3[%c0_3, %c0_4] : memref<8x48xf32, #tpu.memory_space<vmem>>, vector<8x48xf32>
    %c0_5 = arith.constant 0 : index
    %c0_6 = arith.constant 0 : index
    %37 = vector.load %arg4[%c0_5, %c0_6] : memref<8x48xf32, #tpu.memory_space<vmem>>, vector<8x48xf32>
    %c0_7 = arith.constant 0 : index
    %c0_8 = arith.constant 0 : index
    %38 = vector.load %arg5[%c0_7, %c0_8] : memref<1x48xf32, #tpu.memory_space<vmem>>, vector<1x48xf32>
    %cst_9 = arith.constant dense<0.000000e+00> : vector<8x128xf32>
    %39 = tpu.matmul %36, %34, %cst_9 {dimension_numbers = #tpu.dot_dimension_numbers<[1], [0], [0], [1], [0, 0, 1, 1], [], []>} : vector<8x48xf32>, vector<48x128xf32>, vector<8x128xf32> -> vector<8x128xf32>
    %cst_10 = arith.constant dense<0.000000e+00> : vector<8x128xf32>
    %40 = tpu.matmul %37, %35, %cst_10 {dimension_numbers = #tpu.dot_dimension_numbers<[1], [0], [0], [1], [0, 0, 1, 1], [], []>} : vector<8x48xf32>, vector<48x128xf32>, vector<8x128xf32> -> vector<8x128xf32>
    %cst_11 = arith.constant dense<0.000000e+00> : vector<1x128xf32>
    %41 = tpu.matmul %38, %34, %cst_11 {dimension_numbers = #tpu.dot_dimension_numbers<[1], [0], [0], [1], [0, 0, 1, 1], [], []>} : vector<1x48xf32>, vector<48x128xf32>, vector<1x128xf32> -> vector<1x128xf32>
    %42 = arith.mulf %39, %39 : vector<8x128xf32>
    %cst_12 = arith.constant dense<0.000000e+00> : vector<128xf32>
    %43 = vector.multi_reduction <add>, %42, %cst_12 [0] : vector<8x128xf32> to vector<128xf32>
    %44 = vector.shape_cast %43 : vector<128xf32> to vector<1x128xf32>
    %cst_13 = arith.constant dense<0.000000e+00> : vector<128xf32>
    %45 = vector.multi_reduction <add>, %40, %cst_13 [0] : vector<8x128xf32> to vector<128xf32>
    %46 = vector.shape_cast %45 : vector<128xf32> to vector<1x128xf32>
    %c0_14 = arith.constant 0 : index
    %47 = memref.load %arg6[%c0_14] : memref<1xf32, #tpu.memory_space<smem>>
    %48 = vector.broadcast %47 : f32 to vector<1x128xf32>
    %49 = arith.addf %48, %41 : vector<1x128xf32>
    %50 = arith.subf %44, %46 : vector<1x128xf32>
    %cst_15 = arith.constant 5.000000e-01 : f32
    %51 = vector.broadcast %cst_15 : f32 to vector<1x128xf32>
    %52 = arith.mulf %51, %50 : vector<1x128xf32>
    %53 = arith.addf %49, %52 : vector<1x128xf32>
    %c0_16 = arith.constant 0 : index
    %c0_17 = arith.constant 0 : index
    %54 = vector.load %arg7[%c0_16, %c0_17] : memref<1x128xf32, #tpu.memory_space<vmem>>, vector<1x128xf32>
    tpu.vector_store %arg7[%c0_16, %c0_17], %53 {strides = array<i32>} : memref<1x128xf32, #tpu.memory_space<vmem>>, vector<1x128xf32>,
    return
  }
  func.func @transform_0(%arg0: i32) -> (i32, i32) {
    %c0_i32 = arith.constant 0 : i32
    %c0_i32_0 = arith.constant 0 : i32
    return %c0_i32, %arg0 : i32, i32
  }
  func.func @transform_1(%arg0: i32) -> (i32, i32) {
    %c0_i32 = arith.constant 0 : i32
    %c0_i32_0 = arith.constant 0 : i32
    return %c0_i32, %arg0 : i32, i32
  }
  func.func @transform_2(%arg0: i32) -> (i32, i32) {
    %c0_i32 = arith.constant 0 : i32
    %c0_i32_0 = arith.constant 0 : i32
    %c0_i32_1 = arith.constant 0 : i32
    return %c0_i32, %c0_i32_0 : i32, i32
  }
  func.func @transform_3(%arg0: i32) -> (i32, i32) {
    %c0_i32 = arith.constant 0 : i32
    %c0_i32_0 = arith.constant 0 : i32
    %c0_i32_1 = arith.constant 0 : i32
    return %c0_i32, %c0_i32_0 : i32, i32
  }
  func.func @transform_4(%arg0: i32) -> (i32, i32) {
    %c0_i32 = arith.constant 0 : i32
    %c0_i32_0 = arith.constant 0 : i32
    %c0_i32_1 = arith.constant 0 : i32
    return %c0_i32, %c0_i32_0 : i32, i32
  }
  func.func @transform_5(%arg0: i32) -> i32 {
    %c0_i32 = arith.constant 0 : i32
    %c0_i32_0 = arith.constant 0 : i32
    return %c0_i32 : i32
  }
  func.func @transform_6(%arg0: i32) -> (i32, i32) {
    %c0_i32 = arith.constant 0 : i32
    %c0_i32_0 = arith.constant 0 : i32
    return %c0_i32, %arg0 : i32, i32
  }
}

</mosaic_0001>

<llo_original>
// kernel: tpu_custom_call.1
$region0: #{tpu_custom_call.1}
  #allocation0 [shape = 'u32[]', space=smem, size = 0x4, offset = 0x4, fixed_abs, tag = 'smem constant byte address 0x4 - core index']
  #allocation1 [shape = 'u32[72,128]{1,0:T(1,128)}', space=vmem, size = 0x9000, scoped, tag = 'internal scratch']
  #allocation2 [shape = 'f32[1]{0:T(128)S(6)}', space=smem, size = 0x200, scoped, tag = 'scoped memory for tpu_custom_call.1']
  %s0 = inlined_call_operand.hbm [shape: s32[5,128], index: 0, kind: input, shape index: {}]
  %s1 = inlined_call_operand.hbm [shape: f32[8,128], index: 1, kind: input, shape index: {}]
  %s2 = inlined_call_operand.hbm [shape: f32[8,48], index: 2, kind: input, shape index: {}]
  %s3 = inlined_call_operand.hbm [shape: f32[8,48], index: 3, kind: input, shape index: {}]
  %s4 = inlined_call_operand.vmem [shape: f32[1,48], index: 4, kind: input, shape index: {}]
  %s5 = inlined_call_operand.<no memory space> [shape: f32[1], index: 5, kind: input, shape index: {}]
  %s6 = inlined_call_operand.hbm [shape: f32[1,128], index: 6, kind: output, shape index: {}]
  %s7 = sld [smem:[#allocation0]]
  $region50: #{tpu_custom_call.1} parent=0
    _
  %s9 = ssub.s32 1, %s7
  %s10 = scalar_select 0, %s9, %s7
  %11 = sst [smem:[#allocation2]] %s5
  $region1: #{tpu_custom_call.1} parent=0
    #allocation3 [shape = 'u8[4096]{0}', space=vmem, size = 0x1000, scoped, tag = 'input window, operand 0, single buffered']
    #allocation4 [shape = 's32[1]{0}', space=sflag, size = 0x4, scoped, tag = 'scoped memory for tpu_custom_call.1']
    #allocation5 [shape = 's32[1]{0}', space=sflag, size = 0x4, scoped, tag = 'scoped memory for tpu_custom_call.1']
    #allocation6 [shape = 'u8[4096]{0}', space=vmem, size = 0x1000, scoped, tag = 'input window, operand 1, single buffered']
    #allocation7 [shape = 's32[1]{0}', space=sflag, size = 0x4, scoped, tag = 'scoped memory for tpu_custom_call.1']
    #allocation8 [shape = 'u8[4096]{0}', space=vmem, size = 0x1000, scoped, tag = 'input window, operand 2, single buffered']
    #allocation9 [shape = 'u8[4096]{0}', space=vmem, size = 0x1000, scoped, tag = 'input window, operand 3, single buffered']
    #allocation10 [shape = 's32[1]{0}', space=sflag, size = 0x4, scoped, tag = 'scoped memory for tpu_custom_call.1']
    #allocation11 [shape = 'u8[512]{0}', space=vmem, size = 0x400, scoped, tag = 'output window, operand 0, single buffered']
    %12 = vsyncpa [#allocation4], 0
    %13 = vsyncpa [#allocation7], 0
    %14 = vsyncpa [#allocation10], 0
    %15 = vsyncpa [#allocation5], 0
    // Predicated region
    $region2: #{tpu_custom_call.1} parent=1 // pred_check
      _
    $region3: #{tpu_custom_call.1} parent=1 // pred_check_branch
      %17 = sbr.rel (0) target = $region5
    $region4: #{tpu_custom_call.1} parent=1 // pred_region
      %19 = vsyncadd [#allocation4], 0
      %s21 = sshll.u32 %s0, 4
      %s22 = int_to_ptr.hbm [resolvable:$true] %s21
      %s23 = sshll.u32 [#allocation3], 4
      %s24 = int_to_ptr.vmem [resolvable:$true] %s23
      %26 = dma.hbm_to_vmem [thread:$0]  %s22, 128, %s24, [#allocation4]
    $region5: #{tpu_custom_call.1} parent=1 // pred_fallthru
      _
    // Predicated region
    $region6: #{tpu_custom_call.1} parent=1 // pred_check
      _
    $region7: #{tpu_custom_call.1} parent=1 // pred_check_branch
      %28 = sbr.rel (0) target = $region9
    $region8: #{tpu_custom_call.1} parent=1 // pred_region
      %30 = vsyncadd [#allocation7], 0
      %s32 = sshll.u32 %s1, 4
      %s33 = int_to_ptr.hbm [resolvable:$true] %s32
      %s34 = sshll.u32 [#allocation6], 4
      %s35 = int_to_ptr.vmem [resolvable:$true] %s34
      %37 = dma.hbm_to_vmem [thread:$0]  %s33, 128, %s35, [#allocation7]
    $region9: #{tpu_custom_call.1} parent=1 // pred_fallthru
      _
    // Predicated region
    $region10: #{tpu_custom_call.1} parent=1 // pred_check
      _
    $region11: #{tpu_custom_call.1} parent=1 // pred_check_branch
      %39 = sbr.rel (0) target = $region13
    $region12: #{tpu_custom_call.1} parent=1 // pred_region
      %41 = vsyncadd [#allocation7], 0
      %s43 = sshll.u32 %s2, 4
      %s44 = int_to_ptr.hbm [resolvable:$true] %s43
      %s45 = sshll.u32 [#allocation8], 4
      %s46 = int_to_ptr.vmem [resolvable:$true] %s45
      %48 = dma.hbm_to_vmem [thread:$0]  %s44, 128, %s46, [#allocation7]
    $region13: #{tpu_custom_call.1} parent=1 // pred_fallthru
      _
    // Predicated region
    $region14: #{tpu_custom_call.1} parent=1 // pred_check
      _
    $region15: #{tpu_custom_call.1} parent=1 // pred_check_branch
      %50 = sbr.rel (0) target = $region17
    $region16: #{tpu_custom_call.1} parent=1 // pred_region
      %52 = vsyncadd [#allocation10], 0
      %s54 = sshll.u32 %s3, 4
      %s55 = int_to_ptr.hbm [resolvable:$true] %s54
      %s56 = sshll.u32 [#allocation9], 4
      %s57 = int_to_ptr.vmem [resolvable:$true] %s56
      %59 = dma.hbm_to_vmem [thread:$0]  %s55, 128, %s57, [#allocation10]
    $region17: #{tpu_custom_call.1} parent=1 // pred_fallthru
      _
    // Predicated region
    $region18: #{tpu_custom_call.1} parent=1 // pred_check
      _
    $region19: #{tpu_custom_call.1} parent=1 // pred_check_branch
      %61 = sbr.rel (0) target = $region21
    $region20: #{tpu_custom_call.1} parent=1 // pred_region
      _
    $region21: #{tpu_custom_call.1} parent=1 // pred_fallthru
      _
    // Predicated region
    $region22: #{tpu_custom_call.1} parent=1 // pred_check
      _
    $region23: #{tpu_custom_call.1} parent=1 // pred_check_branch
      %63 = sbr.rel (0) target = $region25
    $region24: #{tpu_custom_call.1} parent=1 // pred_region
      _
    $region25: #{tpu_custom_call.1} parent=1 // pred_fallthru
      _
    // Predicated region
    $region26: #{tpu_custom_call.1} parent=1 // pred_check
      _
    $region27: #{tpu_custom_call.1} parent=1 // pred_check_branch
      %65 = sbr.rel (0) target = $region29
    $region28: #{tpu_custom_call.1} parent=1 // pred_region
      %67 = dma.done [#allocation4], 128
    $region29: #{tpu_custom_call.1} parent=1 // pred_fallthru
      _
    // Predicated region
    $region30: #{tpu_custom_call.1} parent=1 // pred_check
      _
    $region31: #{tpu_custom_call.1} parent=1 // pred_check_branch
      %69 = sbr.rel (0) target = $region33
    $region32: #{tpu_custom_call.1} parent=1 // pred_region
      %71 = dma.done [#allocation7], 128
    $region33: #{tpu_custom_call.1} parent=1 // pred_fallthru
      _
    // Predicated region
    $region34: #{tpu_custom_call.1} parent=1 // pred_check
      _
    $region35: #{tpu_custom_call.1} parent=1 // pred_check_branch
      %73 = sbr.rel (0) target = $region37
    $region36: #{tpu_custom_call.1} parent=1 // pred_region
      %75 = dma.done [#allocation7], 128
    $region37: #{tpu_custom_call.1} parent=1 // pred_fallthru
      _
    // Predicated region
    $region38: #{tpu_custom_call.1} parent=1 // pred_check
      _
    $region39: #{tpu_custom_call.1} parent=1 // pred_check_branch
      %77 = sbr.rel (0) target = $region41
    $region40: #{tpu_custom_call.1} parent=1 // pred_region
      %79 = dma.done [#allocation10], 128
    $region41: #{tpu_custom_call.1} parent=1 // pred_fallthru
      _
    %v80 = vld [vmem:[#allocation3] sm:$0x1f]
    %v81 = vld [vmem:[#allocation6] sm:$0xff]
    %v82 = vlaneseq
    %v83 = vshrl.u32 %v82, 7
    %v84 = vadd.s32 %v83, 8
    %v85 = vadd.s32 %v83, 16
    %v86 = vadd.s32 %v83, 24
    %v87 = vadd.s32 %v83, 32
    %v88 = vperm.slane %v80, 0
    %vm89 = vcmp.eq.s32.totalorder %v83, %v88
    %vm90 = vcmp.eq.s32.totalorder %v84, %v88
    %vm91 = vcmp.eq.s32.totalorder %v85, %v88
    %vm92 = vcmp.eq.s32.totalorder %v86, %v88
    %vm93 = vcmp.eq.s32.totalorder %v87, %v88
    %v94 = vsel %vm89, 1, 0
    %v95 = vsel %vm90, 1, 0
    %v96 = vsel %vm91, 1, 0
    %v97 = vsel %vm92, 1, 0
    %v98 = vsel %vm93, 1, 0
    %v99 = vcvt.s32.f32 %v94
    %v100 = vcvt.s32.f32 %v95
    %v101 = vcvt.s32.f32 %v96
    %v102 = vcvt.s32.f32 %v97
    %v103 = vcvt.s32.f32 %v98
    %v104 = vadd.f32 %v99, 0.0
    %v105 = vadd.f32 %v100, 0.0
    %v106 = vadd.f32 %v101, 0.0
    %v107 = vadd.f32 %v102, 0.0
    %v108 = vadd.f32 %v103, 0.0
    %v109 = vperm.slane %v80, 1
    %vm110 = vcmp.eq.s32.totalorder %v83, %v109
    %vm111 = vcmp.eq.s32.totalorder %v84, %v109
    %vm112 = vcmp.eq.s32.totalorder %v85, %v109
    %vm113 = vcmp.eq.s32.totalorder %v86, %v109
    %vm114 = vcmp.eq.s32.totalorder %v87, %v109
    %v115 = vsel %vm110, 1, 0
    %v116 = vsel %vm111, 1, 0
    %v117 = vsel %vm112, 1, 0
    %v118 = vsel %vm113, 1, 0
    %v119 = vsel %vm114, 1, 0
    %v120 = vcvt.s32.f32 %v115
    %v121 = vcvt.s32.f32 %v116
    %v122 = vcvt.s32.f32 %v117
    %v123 = vcvt.s32.f32 %v118
    %v124 = vcvt.s32.f32 %v119
    %v125 = vadd.f32 %v104, %v120
    %v126 = vadd.f32 %v105, %v121
    %v127 = vadd.f32 %v106, %v122
    %v128 = vadd.f32 %v107, %v123
    %v129 = vadd.f32 %v108, %v124
    %v130 = vperm.slane %v80, 2
    %vm131 = vcmp.eq.s32.totalorder %v83, %v130
    %vm132 = vcmp.eq.s32.totalorder %v84, %v130
    %vm133 = vcmp.eq.s32.totalorder %v85, %v130
    %vm134 = vcmp.eq.s32.totalorder %v86, %v130
    %vm135 = vcmp.eq.s32.totalorder %v87, %v130
    %v136 = vsel %vm131, 1, 0
    %v137 = vsel %vm132, 1, 0
    %v138 = vsel %vm133, 1, 0
    %v139 = vsel %vm134, 1, 0
    %v140 = vsel %vm135, 1, 0
    %v141 = vcvt.s32.f32 %v136
    %v142 = vcvt.s32.f32 %v137
    %v143 = vcvt.s32.f32 %v138
    %v144 = vcvt.s32.f32 %v139
    %v145 = vcvt.s32.f32 %v140
    %v146 = vadd.f32 %v125, %v141
    %v147 = vadd.f32 %v126, %v142
    %v148 = vadd.f32 %v127, %v143
    %v149 = vadd.f32 %v128, %v144
    %v150 = vadd.f32 %v129, %v145
    %v151 = vperm.slane %v80, 3
    %vm152 = vcmp.eq.s32.totalorder %v83, %v151
    %vm153 = vcmp.eq.s32.totalorder %v84, %v151
    %vm154 = vcmp.eq.s32.totalorder %v85, %v151
    %vm155 = vcmp.eq.s32.totalorder %v86, %v151
    %vm156 = vcmp.eq.s32.totalorder %v87, %v151
    %v157 = vsel %vm152, 1, 0
    %v158 = vsel %vm153, 1, 0
    %v159 = vsel %vm154, 1, 0
    %v160 = vsel %vm155, 1, 0
    %v161 = vsel %vm156, 1, 0
    %v162 = vcvt.s32.f32 %v157
    %v163 = vcvt.s32.f32 %v158
    %v164 = vcvt.s32.f32 %v159
    %v165 = vcvt.s32.f32 %v160
    %v166 = vcvt.s32.f32 %v161
    %v167 = vadd.f32 %v146, %v162
    %v168 = vadd.f32 %v147, %v163
    %v169 = vadd.f32 %v148, %v164
    %v170 = vadd.f32 %v149, %v165
    %v171 = vadd.f32 %v150, %v166
    %v172 = vperm.slane %v80, 4
    %vm173 = vcmp.eq.s32.totalorder %v83, %v172
    %vm174 = vcmp.eq.s32.totalorder %v84, %v172
    %vm175 = vcmp.eq.s32.totalorder %v85, %v172
    %vm176 = vcmp.eq.s32.totalorder %v86, %v172
    %vm177 = vcmp.eq.s32.totalorder %v87, %v172
    %v178 = vsel %vm173, 1, 0
    %v179 = vsel %vm174, 1, 0
    %v180 = vsel %vm175, 1, 0
    %v181 = vsel %vm176, 1, 0
    %v182 = vsel %vm177, 1, 0
    %v183 = vcvt.s32.f32 %v178
    %v184 = vcvt.s32.f32 %v179
    %v185 = vcvt.s32.f32 %v180
    %v186 = vcvt.s32.f32 %v181
    %v187 = vcvt.s32.f32 %v182
    %v188 = vadd.f32 %v167, %v183
    %v189 = vadd.f32 %v168, %v184
    %v190 = vadd.f32 %v169, %v185
    %v191 = vadd.f32 %v170, %v186
    %v192 = vadd.f32 %v171, %v187
    %v193 = vmul.f32 %v188, %v188
    %v194 = vmul.f32 %v189, %v189
    %v195 = vmul.f32 %v190, %v190
    %v196 = vmul.f32 %v191, %v191
    %v197 = vmul.f32 %v192, %v192
    %v198 = vmul.f32 %v81, %v81
    %v199 = vld [vmem:[#allocation8] sm:$0xff]
    %v200 = vld [vmem:[#allocation9] sm:$0xff]
    %v201 = vld [vmem:[%s4] sm:$0x1]
    %vm202 = vcmask 392192
    %v204 = vsel %vm202, %v199, 0
    %206 = vmatpush.msra.mxu0 0.0
    %207 = vmatpush.msra.mxu0 0.0
    %208 = vmatpush.msra.mxu0 0.0
    %209 = vmatpush.msra.mxu0 0.0
    %210 = vmatpush.msra.mxu0 0.0
    %211 = vmatpush.msra.mxu0 0.0
    %212 = vmatpush.msra.mxu0 0.0
    %213 = vmatpush.msra.mxu0 0.0
    %214 = vmatpush.msra.mxu0 0.0
    %215 = vmatpush.msra.mxu0 0.0
    %216 = vmatpush.msra.mxu0 %v81
    %217 = vmatpush.msra.mxu0 %v192
    %218 = vmatpush.msra.mxu0 %v191
    %219 = vmatpush.msra.mxu0 %v190
    %220 = vmatpush.msra.mxu0 %v189
    %221 = vmatpush.msra.mxu0 %v188
    %222 = vmatmul.f32.gmra.mxu0 %v204
    %v223 = vpop.f32.mrf.mxu0
    %v224 = vadd.f32 0.0, %v223
    %225 = vdwg.mxu0
    %v227 = vsel %vm202, %v200, 0
    %229 = vmatpush.msra.mxu0 0.0
    %230 = vmatpush.msra.mxu0 0.0
    %231 = vmatpush.msra.mxu0 0.0
    %232 = vmatpush.msra.mxu0 0.0
    %233 = vmatpush.msra.mxu0 0.0
    %234 = vmatpush.msra.mxu0 0.0
    %235 = vmatpush.msra.mxu0 0.0
    %236 = vmatpush.msra.mxu0 0.0
    %237 = vmatpush.msra.mxu0 0.0
    %238 = vmatpush.msra.mxu0 0.0
    %239 = vmatpush.msra.mxu0 %v198
    %240 = vmatpush.msra.mxu0 %v197
    %241 = vmatpush.msra.mxu0 %v196
    %242 = vmatpush.msra.mxu0 %v195
    %243 = vmatpush.msra.mxu0 %v194
    %244 = vmatpush.msra.mxu0 %v193
    %245 = vmatmul.f32.gmra.mxu0 %v227
    %v246 = vpop.f32.mrf.mxu0
    %v247 = vadd.f32 0.0, %v246
    %248 = vdwg.mxu0
    %v250 = vsel %vm202, %v201, 0
    %252 = vmatpush.msra.mxu0 0.0
    %253 = vmatpush.msra.mxu0 0.0
    %254 = vmatpush.msra.mxu0 0.0
    %255 = vmatpush.msra.mxu0 0.0
    %256 = vmatpush.msra.mxu0 0.0
    %257 = vmatpush.msra.mxu0 0.0
    %258 = vmatpush.msra.mxu0 0.0
    %259 = vmatpush.msra.mxu0 0.0
    %260 = vmatpush.msra.mxu0 0.0
    %261 = vmatpush.msra.mxu0 0.0
    %262 = vmatpush.msra.mxu0 %v81
    %263 = vmatpush.msra.mxu0 %v192
    %264 = vmatpush.msra.mxu0 %v191
    %265 = vmatpush.msra.mxu0 %v190
    %266 = vmatpush.msra.mxu0 %v189
    %267 = vmatpush.msra.mxu0 %v188
    %268 = vmatmul.f32.gmra.mxu0 %v250
    %v269 = vpop.f32.mrf.mxu0
    %v270 = vadd.f32 0.0, %v269
    %271 = vdwg.mxu0
    %v272 = vmul.f32 %v224, %v224
    %v273 = vrot.slane %v272, 4
    %v274 = vadd.f32 %v272, %v273
    %v275 = vrot.slane %v274, 2
    %v276 = vadd.f32 %v274, %v275
    %v277 = vrot.slane %v276, 1
    %v278 = vadd.f32 %v276, %v277
    %v279 = vrot.slane %v247, 4
    %v280 = vadd.f32 %v247, %v279
    %v281 = vrot.slane %v280, 2
    %v282 = vadd.f32 %v280, %v281
    %v283 = vrot.slane %v282, 1
    %v284 = vadd.f32 %v282, %v283
    %s285 = sld [smem:[#allocation2]]
    %v286 = vstv %s285
    %v287 = vadd.f32 %v286, %v270
    %v288 = vsub.f32 %v278, %v284
    %v289 = vmul.f32 %v288, 0.5
    %v290 = vadd.f32 %v287, %v289
    %291 = vst [vmem:[#allocation11] sm:$0x1] %v290
    // Predicated region
    $region42: #{tpu_custom_call.1} parent=1 // pred_check
      _
    $region43: #{tpu_custom_call.1} parent=1 // pred_check_branch
      %293 = sbr.rel (0) target = $region45
    $region44: #{tpu_custom_call.1} parent=1 // pred_region
      %295 = vsyncadd [#allocation5], 0
      %s297 = sshll.u32 [#allocation11], 4
      %s298 = int_to_ptr.vmem [resolvable:$true] %s297
      %s299 = sshll.u32 %s6, 4
      %s300 = int_to_ptr.hbm [resolvable:$true] %s299
      %302 = dma.vmem_to_hbm [thread:$0]  %s298, 16, %s300, [#allocation5]
    $region45: #{tpu_custom_call.1} parent=1 // pred_fallthru
      _
    // Predicated region
    $region46: #{tpu_custom_call.1} parent=1 // pred_check
      _
    $region47: #{tpu_custom_call.1} parent=1 // pred_check_branch
      %304 = sbr.rel (0) target = $region49
    $region48: #{tpu_custom_call.1} parent=1 // pred_region
      %306 = dma.done [#allocation5], 16
    $region49: #{tpu_custom_call.1} parent=1 // pred_fallthru
      _
    %307 = vsyncpa [#allocation4], 1
    %308 = vsyncpa [#allocation7], 1
    %309 = vsyncpa [#allocation10], 1
    %310 = vsyncpa [#allocation5], 1

</llo_original>
